<compile_context>
chip_gen: v7x
topology: tpu7x:2x2x1
jax: 0.10.0
libtpu: 0.0.40
codegen_flags: <defaults>
</compile_context>

<pallas_src>
import jax
import jax.numpy as jnp
from jax.experimental import pallas as pl
from jax.experimental.pallas import tpu as pltpu

_LANE_CHUNK = 2048  # 16 f32 vregs per chunk -> bounded register pressure.


def linear_kernel(w_ref, b_ref, xt_ref, ot_ref):
    """VPU-only Linear(IN -> 1) on a lane-dense batch tile.

    w_ref:  SMEM [IN]      weight scalars
    b_ref:  SMEM [1]       bias scalar
    xt_ref: VMEM [IN, TB]  transposed activations (batch on the lane axis)
    ot_ref: VMEM [1,  TB]  transposed output      (batch on the lane axis)
    """
    in_features, tb = xt_ref.shape                 # static (IN = 4, TB = tile lanes)
    w = [w_ref[k] for k in range(in_features)]     # hoist SMEM scalar loads
    bias = b_ref[0]

    # Static chunking of the lane axis: each chunk is an independent
    # load -> 4x splat-multiply-add -> single fused wide store sequence.
    off = 0
    while off < tb:
        csz = min(_LANE_CHUNK, tb - off)
        acc = xt_ref[0:1, off:off + csz] * w[0]            # f32 accumulation (VPU)
        for k in range(1, in_features):                      # static unroll, IN = 4
            acc = acc + xt_ref[k:k + 1, off:off + csz] * w[k]
        ot_ref[0:1, off:off + csz] = (acc + bias).astype(ot_ref.dtype)
        off += csz


def _pick_lane_tile(batch, cap):
    """Lane-tile size: big tiles, but >=2 grid steps for large B (v7x dual-TC)."""
    if batch <= 256:
        return batch                         # full-extent single block (always legal)
    if batch >= 2 * cap:
        return cap                           # >=2 steps automatically
    half = -(-batch // 2)
    return min(cap, -(-half // 128) * 128)   # 2 steps, 128-lane aligned


def linear_pallas(x, weight, bias, *, transposed_input=False, max_lane_tile=32768):
    """Linear(IN -> 1) via a Pallas TPU kernel.

    x: [B, IN] (or [IN, B] if transposed_input=True)
    weight: [1, IN] (PyTorch nn.Linear layout), bias: [1]
    Returns [B, 1].
    """
    if transposed_input:
        IN, B = x.shape
        xt = x
    else:
        B, IN = x.shape
        # One extra HBM pass; fuse into the producer (transposed_input=True)
        # when this layer sits inside a larger jitted graph.
        xt = x.T
    OUT, IN_w = weight.shape
    assert OUT == 1 and IN_w == IN, "kernel specialized for Linear(IN, 1)"

    tb = _pick_lane_tile(B, max_lane_tile)
    num_steps = -(-B // tb)                  # ragged last block, no wrapper padding

    w_vec = weight.reshape(IN).astype(jnp.float32)   # 4 scalars -> SMEM
    b_vec = bias.reshape(OUT).astype(jnp.float32)    # 1 scalar  -> SMEM

    x_spec = pl.BlockSpec((IN, tb), lambda j: (0, j))
    if num_steps >= 3:
        try:  # optional deeper pipelining of the streaming activation input
            x_spec = pl.BlockSpec((IN, tb), lambda j: (0, j),
                                  pipeline_mode=pl.Buffered(3))
        except (TypeError, AttributeError):
            pass

    yt = pl.pallas_call(
        linear_kernel,
        out_shape=jax.ShapeDtypeStruct((1, B), x.dtype),
        grid=(num_steps,),
        in_specs=[
            pl.BlockSpec(memory_space=pltpu.MemorySpace.SMEM),   # weight scalars
            pl.BlockSpec(memory_space=pltpu.MemorySpace.SMEM),   # bias scalar
            x_spec,                                              # activation tile
        ],
        out_specs=pl.BlockSpec((1, tb), lambda j: (0, j)),       # lane-dense output
        compiler_params=pltpu.CompilerParams(
            dimension_semantics=("parallel",)),                  # dual-TC on v7x
        cost_estimate=pl.CostEstimate(flops=8 * B, transcendentals=0,
                                      bytes_accessed=20 * B + 32),
    )(w_vec, b_vec, xt)

    return yt.reshape(B, OUT)                # [1,B] -> [B,1] is a free reshape


def linear_forward(x, weight, bias, *, min_pallas_batch=1024, **kwargs):
    """MyModel.forward. Below the threshold a standalone pallas_call is pure
    fixed overhead for 8*B FLOPs, so let XLA fuse it instead."""
    if x.shape[0] < min_pallas_batch:
        return x @ weight.T + bias.reshape(1, -1)
    return linear_pallas(x, weight, bias, **kwargs)


def init_params(key, in_features=4, out_features=1):
    # PyTorch default init: U(-1/sqrt(in), 1/sqrt(in)); weight [out, in], bias [out].
    kw, kb = jax.random.split(key)
    bound = 1.0 / jnp.sqrt(jnp.float32(in_features))
    w = jax.random.uniform(kw, (out_features, in_features), jnp.float32,
                           minval=-bound, maxval=bound)
    b = jax.random.uniform(kb, (out_features,), jnp.float32,
                           minval=-bound, maxval=bound)
    return w, b


if __name__ == "__main__":
    key = jax.random.PRNGKey(0)
    k_p, k1, k2, k3 = jax.random.split(key, 4)

    IN, OUT = 4, 1
    w, b = init_params(k_p, IN, OUT)

    def ref_fn(x):   # exact f32 VPU reference (no matmul precision ambiguity)
        return (x * w.reshape(1, IN)).sum(axis=-1, keepdims=True) + b.reshape(1, OUT)

    # 1) Small shape consistent with the module (batch=8): force the kernel path.
    x1 = jax.random.normal(k1, (8, IN), dtype=jnp.float32)
    o1 = linear_pallas(x1, w, b)
    jax.block_until_ready(o1)
    assert o1.shape == (8, OUT)
    assert jnp.allclose(o1, ref_fn(x1), atol=1e-5, rtol=1e-5), "mismatch (B=8, kernel)"

    # Dispatcher fast path (XLA) at the same small shape.
    o1b = linear_forward(x1, w, b)
    assert jnp.allclose(o1b, ref_fn(x1), atol=1e-5, rtol=1e-5), "mismatch (B=8, XLA)"

    # 2) Non-multiple-of-128 batch: 2-step grid with un-padded ragged last block.
    x2 = jax.random.normal(k2, (2500, IN), dtype=jnp.float32)
    o2 = linear_pallas(x2, w, b)
    jax.block_until_ready(o2)
    assert o2.shape == (2500, OUT)
    assert jnp.allclose(o2, ref_fn(x2), atol=1e-5, rtol=1e-5), "mismatch (B=2500)"

    # 3) Large batch: hits the 32K-lane tile cap, multi-step grid, ragged tail.
    x3 = jax.random.normal(k3, (70000, IN), dtype=jnp.float32)
    o3 = linear_pallas(x3, w, b)
    jax.block_until_ready(o3)
    assert o3.shape == (70000, OUT)
    assert jnp.allclose(o3, ref_fn(x3), atol=1e-5, rtol=1e-5), "mismatch (B=70000)"

    print("KERNEL_OK")
</pallas_src>

<mosaic_0001>
module attributes {stable_mosaic.version = 11 : i64} {
  func.func @linear_kernel(%arg0: i32, %arg1: memref<4xf32, #tpu.memory_space<smem>>, %arg2: memref<1xf32, #tpu.memory_space<smem>>, %arg3: memref<4x8xf32, #tpu.memory_space<vmem>>, %arg4: memref<1x8xf32, #tpu.memory_space<vmem>>) attributes {dimension_semantics = [#tpu.dimension_semantics<parallel>], iteration_bounds = array<i64: 1>, scalar_prefetch = 0 : i64, scratch_operands = 0 : i64, tpu.core_type = #tpu.core_type<tc>, window_params = [{transform_indices = @transform_0, window_bounds = array<i64: 4>}, {transform_indices = @transform_1, window_bounds = array<i64: 1>}, {transform_indices = @transform_2, window_bounds = array<i64: 4, 8>}, {transform_indices = @transform_3, window_bounds = array<i64: 1, 8>}]} {
    %c0 = arith.constant 0 : index
    %0 = memref.load %arg1[%c0] : memref<4xf32, #tpu.memory_space<smem>>
    %c1 = arith.constant 1 : index
    %1 = memref.load %arg1[%c1] : memref<4xf32, #tpu.memory_space<smem>>
    %c2 = arith.constant 2 : index
    %2 = memref.load %arg1[%c2] : memref<4xf32, #tpu.memory_space<smem>>
    %c3 = arith.constant 3 : index
    %3 = memref.load %arg1[%c3] : memref<4xf32, #tpu.memory_space<smem>>
    %c0_0 = arith.constant 0 : index
    %4 = memref.load %arg2[%c0_0] : memref<1xf32, #tpu.memory_space<smem>>
    %c0_1 = arith.constant 0 : index
    %c0_2 = arith.constant 0 : index
    %5 = vector.load %arg3[%c0_1, %c0_2] : memref<4x8xf32, #tpu.memory_space<vmem>>, vector<1x8xf32>
    %6 = vector.broadcast %0 : f32 to vector<1x8xf32>
    %7 = arith.mulf %5, %6 : vector<1x8xf32>
    %c1_3 = arith.constant 1 : index
    %c0_4 = arith.constant 0 : index
    %8 = vector.load %arg3[%c1_3, %c0_4] : memref<4x8xf32, #tpu.memory_space<vmem>>, vector<1x8xf32>
    %9 = vector.broadcast %1 : f32 to vector<1x8xf32>
    %10 = arith.mulf %8, %9 : vector<1x8xf32>
    %11 = arith.addf %7, %10 : vector<1x8xf32>
    %c2_5 = arith.constant 2 : index
    %c0_6 = arith.constant 0 : index
    %12 = vector.load %arg3[%c2_5, %c0_6] : memref<4x8xf32, #tpu.memory_space<vmem>>, vector<1x8xf32>
    %13 = vector.broadcast %2 : f32 to vector<1x8xf32>
    %14 = arith.mulf %12, %13 : vector<1x8xf32>
    %15 = arith.addf %11, %14 : vector<1x8xf32>
    %c3_7 = arith.constant 3 : index
    %c0_8 = arith.constant 0 : index
    %16 = vector.load %arg3[%c3_7, %c0_8] : memref<4x8xf32, #tpu.memory_space<vmem>>, vector<1x8xf32>
    %17 = vector.broadcast %3 : f32 to vector<1x8xf32>
    %18 = arith.mulf %16, %17 : vector<1x8xf32>
    %19 = arith.addf %15, %18 : vector<1x8xf32>
    %20 = vector.broadcast %4 : f32 to vector<1x8xf32>
    %21 = arith.addf %19, %20 : vector<1x8xf32>
    %c0_9 = arith.constant 0 : index
    %c0_10 = arith.constant 0 : index
    %22 = vector.load %arg4[%c0_9, %c0_10] : memref<1x8xf32, #tpu.memory_space<vmem>>, vector<1x8xf32>
    tpu.vector_store %arg4[%c0_9, %c0_10], %21 {strides = array<i32>} : memref<1x8xf32, #tpu.memory_space<vmem>>, vector<1x8xf32>,
    return
  }
  func.func @transform_0(%arg0: i32) -> i32 {
    %c0_i32 = arith.constant 0 : i32
    %c0_i32_0 = arith.constant 0 : i32
    return %c0_i32 : i32
  }
  func.func @transform_1(%arg0: i32) -> i32 {
    %c0_i32 = arith.constant 0 : i32
    %c0_i32_0 = arith.constant 0 : i32
    return %c0_i32 : i32
  }
  func.func @transform_2(%arg0: i32) -> (i32, i32) {
    %c0_i32 = arith.constant 0 : i32
    %c0_i32_0 = arith.constant 0 : i32
    return %c0_i32, %arg0 : i32, i32
  }
  func.func @transform_3(%arg0: i32) -> (i32, i32) {
    %c0_i32 = arith.constant 0 : i32
    %c0_i32_0 = arith.constant 0 : i32
    return %c0_i32, %arg0 : i32, i32
  }
}

</mosaic_0001>

<llo_original>
// kernel: tpu_custom_call.1
$region0: #{tpu_custom_call.1}
  #allocation0 [shape = 'u32[]', space=smem, size = 0x4, offset = 0x4, fixed_abs, tag = 'smem constant byte address 0x4 - core index']
  #allocation1 [shape = 'u32[144,128]{1,0:T(1,128)}', space=vmem, size = 0x12000, scoped, tag = 'internal scratch']
  #allocation2 [shape = 'f32[1]{0:T(128)S(6)}', space=smem, size = 0x200, scoped, tag = 'scoped memory for tpu_custom_call.1']
  %s0 = inlined_call_operand.vmem [shape: f32[4], index: 0, kind: input, shape index: {}]
  %s1 = inlined_call_operand.<no memory space> [shape: f32[1], index: 1, kind: input, shape index: {}]
  %s2 = inlined_call_operand.vmem [shape: f32[4,8], index: 2, kind: input, shape index: {}]
  %s3 = inlined_call_operand.hbm [shape: f32[1,8], index: 3, kind: output, shape index: {}]
  %s4 = sld [smem:[#allocation0]]
  $region26: #{tpu_custom_call.1} parent=0
    _
  %s6 = ssub.s32 1, %s4
  %s7 = scalar_select 0, %s6, %s4
  %8 = sst [smem:[#allocation2]] %s1
  $region1: #{tpu_custom_call.1} parent=0
    #allocation3 [shape = 'u8[512]{0}', space=smem, size = 0x200, scoped, tag = 'input window, operand 0, single buffered']
    #allocation4 [shape = 's32[1]{0}', space=sflag, size = 0x4, scoped, tag = 'scoped memory for tpu_custom_call.1']
    #allocation5 [shape = 's32[1]{0}', space=sflag, size = 0x4, scoped, tag = 'scoped memory for tpu_custom_call.1']
    #allocation6 [shape = 'u8[512]{0}', space=vmem, size = 0x400, scoped, tag = 'output window, operand 0, single buffered']
    %9 = vsyncpa [#allocation5], 0
    %10 = vsyncpa [#allocation4], 0
    // Predicated region
    $region2: #{tpu_custom_call.1} parent=1 // pred_check
      _
    $region3: #{tpu_custom_call.1} parent=1 // pred_check_branch
      %12 = sbr.rel (0) target = $region5
    $region4: #{tpu_custom_call.1} parent=1 // pred_region
      %s14 = ssub.s32 16, 16
      %15 = vsyncadd [#allocation5], %s14
      %s17 = sshll.u32 %s0, 4
      %s18 = int_to_ptr.vmem [resolvable:$true] %s17
      %20 = dma.vmem_to_smem %s18, 16, [#allocation3], [#allocation5]
    $region5: #{tpu_custom_call.1} parent=1 // pred_fallthru
      _
    // Predicated region
    $region6: #{tpu_custom_call.1} parent=1 // pred_check
      _
    $region7: #{tpu_custom_call.1} parent=1 // pred_check_branch
      %22 = sbr.rel (0) target = $region9
    $region8: #{tpu_custom_call.1} parent=1 // pred_region
      _
    $region9: #{tpu_custom_call.1} parent=1 // pred_fallthru
      _
    // Predicated region
    $region10: #{tpu_custom_call.1} parent=1 // pred_check
      _
    $region11: #{tpu_custom_call.1} parent=1 // pred_check_branch
      %24 = sbr.rel (0) target = $region13
    $region12: #{tpu_custom_call.1} parent=1 // pred_region
      _
    $region13: #{tpu_custom_call.1} parent=1 // pred_fallthru
      _
    // Predicated region
    $region14: #{tpu_custom_call.1} parent=1 // pred_check
      _
    $region15: #{tpu_custom_call.1} parent=1 // pred_check_branch
      %26 = sbr.rel (0) target = $region17
    $region16: #{tpu_custom_call.1} parent=1 // pred_region
      %27 = dma.done [#allocation5], 16
    $region17: #{tpu_custom_call.1} parent=1 // pred_fallthru
      _
    %28 = sfence
    %s29 = sld [smem:[#allocation3]]
    %s30 = sld [smem:[#allocation3 + $0x1]]
    %s31 = sld [smem:[#allocation3 + $0x2]]
    %s32 = sld [smem:[#allocation3 + $0x3]]
    %s33 = sld [smem:[#allocation2]]
    %v34 = vld [vmem:[%s2] sm:$0x1]
    %v35 = vstv %s29
    %v36 = vmul.f32 %v34, %v35
    %v37 = vld [vmem:[%s2 + $0x1] sm:$0x1]
    %v38 = vstv %s30
    %v39 = vmul.f32 %v37, %v38
    %v40 = vadd.f32 %v36, %v39
    %v41 = vld [vmem:[%s2 + $0x2] sm:$0x1]
    %v42 = vstv %s31
    %v43 = vmul.f32 %v41, %v42
    %v44 = vadd.f32 %v40, %v43
    %v45 = vld [vmem:[%s2 + $0x3] sm:$0x1]
    %v46 = vstv %s32
    %v47 = vmul.f32 %v45, %v46
    %v48 = vadd.f32 %v44, %v47
    %v49 = vstv %s33
    %v50 = vadd.f32 %v48, %v49
    %vm51 = vcmask 57344
    %52 = vst.msk [vmem:[#allocation6] sm:$0x1] %vm51, %v50
    // Predicated region
    $region18: #{tpu_custom_call.1} parent=1 // pred_check
      _
    $region19: #{tpu_custom_call.1} parent=1 // pred_check_branch
      %54 = sbr.rel (0) target = $region21
    $region20: #{tpu_custom_call.1} parent=1 // pred_region
      %s56 = ssub.s32 16, 16
      %57 = vsyncadd [#allocation4], %s56
      %s59 = sshll.u32 [#allocation6], 4
      %s60 = int_to_ptr.vmem [resolvable:$true] %s59
      %62 = dma.vmem_to_hbm [thread:$0]  %s60, 16, %s3, [#allocation4]
    $region21: #{tpu_custom_call.1} parent=1 // pred_fallthru
      _
    // Predicated region
    $region22: #{tpu_custom_call.1} parent=1 // pred_check
      _
    $region23: #{tpu_custom_call.1} parent=1 // pred_check_branch
      %64 = sbr.rel (0) target = $region25
    $region24: #{tpu_custom_call.1} parent=1 // pred_region
      %65 = dma.done [#allocation4], 16
    $region25: #{tpu_custom_call.1} parent=1 // pred_fallthru
      _
    %66 = vsyncpa [#allocation4], 1
    %67 = vsyncpa [#allocation5], 1

</llo_original>
